<compile_context>
chip_gen: v5e
topology: v5e:2x2
jax: 0.10.0
libtpu: 0.0.40
codegen_flags: <defaults>
</compile_context>

<pallas_src>
import functools
import math
from typing import NamedTuple

import jax
import jax.numpy as jnp
from jax.experimental import pallas as pl
from jax.experimental.pallas import tpu as pltpu


def _round_up(x, m):
    return (x + m - 1) // m * m


class PackedParams(NamedTuple):
    w1: jax.Array       # [d_in, d_h]   bf16   (block-diagonal L1)
    w_rest: jax.Array   # [4, d_h, d_h] bf16   (block-diagonal L2..L5)
    b: jax.Array        # [5, 1, d_h]   f32    (lane-tiled biases)


class PackMeta(NamedTuple):
    pack: int           # batch-fold factor P
    d_in: int
    d_h: int
    obs_dim: int
    num_outputs: int


def _mlp_kernel(x_ref, w1_ref, w_ref, b_ref, o_ref):
    """Fused 5-layer MLP on one (folded) batch tile.

    x_ref : [TILE_B, D_IN]  f32  (cast to bf16 in-kernel)
    w1_ref: [D_IN, D_H]     bf16
    w_ref : [4, D_H, D_H]   bf16 (layers 2..5)
    b_ref : [5, 1, D_H]     f32
    o_ref : [TILE_B, D_H]   bf16
    """
    # Layer 1: Linear + ReLU (bf16 MXU operands, f32 accumulate/elementwise).
    x = x_ref[...].astype(jnp.bfloat16)
    z = jnp.dot(x, w1_ref[...], preferred_element_type=jnp.float32) + b_ref[0]
    h = jnp.maximum(z, 0.0).astype(jnp.bfloat16)

    # Layers 2..4: Linear + ReLU.
    for i in range(3):
        z = jnp.dot(h, w_ref[i], preferred_element_type=jnp.float32) + b_ref[i + 1]
        h = jnp.maximum(z, 0.0).astype(jnp.bfloat16)

    # Layer 5: Linear + Sigmoid.  exp and approx reciprocal both go to the EUP.
    z = jnp.dot(h, w_ref[3], preferred_element_type=jnp.float32) + b_ref[4]
    o_ref[...] = pl.reciprocal(1.0 + jnp.exp(-z), approx=True).astype(o_ref.dtype)


def pack_params(params):
    """Pack/pad the 5 (W [in,out], b [1,out]) layers ONCE at init time.

    Uses batch-folded block-diagonal packing (kron(I_P, W)) when the layer
    widths divide 128, so every lane of the 128-wide tiles carries real data.
    Falls back to plain zero padding (P=1) otherwise.
    """
    obs_dim = params[0][0].shape[0]
    num_outputs = params[-1][0].shape[1]

    if obs_dim == num_outputs and 128 % num_outputs == 0:
        pack = 128 // num_outputs
    else:
        pack = 1
    d_in = _round_up(pack * obs_dim, 128)
    d_h = _round_up(pack * num_outputs, 128)

    eye = jnp.eye(pack, dtype=jnp.float32)

    def place_w(w, rows, cols):
        blk = jnp.kron(eye, w.astype(jnp.float32))            # block diagonal
        out = jnp.zeros((rows, cols), jnp.float32)
        out = out.at[:blk.shape[0], :blk.shape[1]].set(blk)
        return out.astype(jnp.bfloat16)

    def place_b(b):
        tiled = jnp.tile(b.reshape(-1).astype(jnp.float32), pack)
        out = jnp.zeros((1, d_h), jnp.float32)
        return out.at[0, :tiled.shape[0]].set(tiled)

    w1 = place_w(params[0][0], d_in, d_h)
    w_rest = jnp.stack([place_w(params[i][0], d_h, d_h) for i in range(1, 5)])
    b = jnp.stack([place_b(bi) for _, bi in params])

    return (PackedParams(w1, w_rest, b),
            PackMeta(pack, d_in, d_h, obs_dim, num_outputs))


def end2end_forward(x, packed, meta, *, tile_b_max=2048):
    """x: [B, obs_dim] f32 ('obs_flat').  Returns [B, num_outputs] f32."""
    B = x.shape[0]
    pack, d_in, d_h = meta.pack, meta.d_in, meta.d_h
    obs_dim, num_outputs = meta.obs_dim, meta.num_outputs

    b_f = -(-B // pack)                       # folded batch rows
    # Batch tile: multiple of 8 sublanes; split into >=2 grid steps whenever
    # possible (v7x megacore); capped so double-buffered x/out tiles stay far
    # below the 16/32 MiB scoped-VMEM defaults on v5e/v6e/v7x.
    if b_f <= 8:
        tile_b = 8
    else:
        tile_b = min(tile_b_max, _round_up(-(-b_f // 2), 8))
    b_f_pad = _round_up(b_f, tile_b)

    # Fold the batch into lane-dense rows: [B, obs] -> [b_f_pad, pack*obs]
    # (row-major reshape, no bf16 copy; zero rows only if B doesn't divide).
    rows_needed = b_f_pad * pack
    x_in = x if rows_needed == B else jnp.pad(x, ((0, rows_needed - B), (0, 0)))
    x_f = x_in.reshape(b_f_pad, pack * obs_dim)
    if pack * obs_dim != d_in:                # fallback (P=1) lane padding
        x_f = jnp.pad(x_f, ((0, 0), (0, d_in - pack * obs_dim)))

    grid = (b_f_pad // tile_b,)
    out_f = pl.pallas_call(
        _mlp_kernel,
        out_shape=jax.ShapeDtypeStruct((b_f_pad, d_h), jnp.bfloat16),
        grid=grid,
        in_specs=[
            # Activations stream per batch tile.
            pl.BlockSpec((tile_b, d_in), lambda i: (i, 0)),
            # Weights / biases: constant block index -> VMEM-resident.
            pl.BlockSpec((d_in, d_h), lambda i: (0, 0)),
            pl.BlockSpec((4, d_h, d_h), lambda i: (0, 0, 0)),
            pl.BlockSpec((5, 1, d_h), lambda i: (0, 0, 0)),
        ],
        out_specs=pl.BlockSpec((tile_b, d_h), lambda i: (i, 0)),
        compiler_params=pltpu.CompilerParams(
            dimension_semantics=("parallel",)),
    )(x_f, packed.w1, packed.w_rest, packed.b)

    # Unfold back to [B, num_outputs]; return f32 to match module semantics.
    out = out_f[:, :pack * num_outputs].reshape(rows_needed, num_outputs)
    return out[:B].astype(jnp.float32)


def init_linear_params(key, fan_in, fan_out):
    """PyTorch-style nn.Linear init: U(-1/sqrt(fan_in), 1/sqrt(fan_in)).
    Returns W as [in, out] (pre-transposed for x @ W) and b as [1, out]."""
    kw, kb = jax.random.split(key)
    bound = 1.0 / math.sqrt(fan_in)
    w = jax.random.uniform(kw, (fan_in, fan_out), jnp.float32, -bound, bound)
    b = jax.random.uniform(kb, (1, fan_out), jnp.float32, -bound, bound)
    return w, b


def pure_jax_reference(x, params):
    h = x
    for i, (w, b) in enumerate(params):
        h = h @ w + b
        h = jnp.maximum(h, 0.0) if i < len(params) - 1 else jax.nn.sigmoid(h)
    return h


if __name__ == "__main__":
    # Small shapes consistent with the module: np.product(obs_space.shape)=32,
    # num_outputs=32.
    OBS_DIM = 32
    NUM_OUTPUTS = 32

    key = jax.random.PRNGKey(0)

    # 5 linear layers of self.model.
    layer_dims = [(OBS_DIM, NUM_OUTPUTS)] + [(NUM_OUTPUTS, NUM_OUTPUTS)] * 4
    params = []
    for fan_in, fan_out in layer_dims:
        key, sub = jax.random.split(key)
        params.append(init_linear_params(sub, fan_in, fan_out))

    # TODO(synk): value_function() (self.value_model head) is not part of
    # forward(); it is not implemented here.

    # One-time packing (hoisted out of the per-call path).
    packed, meta = pack_params(params)
    packed = jax.tree_util.tree_map(jax.block_until_ready, packed)

    fwd = jax.jit(functools.partial(end2end_forward, meta=meta))

    # Check 1: small batch (single grid step, folded-batch path).
    key, kx = jax.random.split(key)
    x = jax.random.normal(kx, (8, OBS_DIM), jnp.float32)
    out = jax.block_until_ready(fwd(x, packed))
    ref = pure_jax_reference(x, params)
    assert out.shape == (8, NUM_OUTPUTS)
    # bf16 MXU operands + bf16 output + approx reciprocal -> loose tolerance.
    assert jnp.allclose(out, ref, atol=4e-2, rtol=0.0), "mismatch vs JAX reference (B=8)"

    # Check 2: ragged batch, >=2 grid steps, row padding exercised.
    key, kx2 = jax.random.split(key)
    x2 = jax.random.normal(kx2, (44, OBS_DIM), jnp.float32)
    out2 = jax.block_until_ready(end2end_forward(x2, packed, meta, tile_b_max=16))
    ref2 = pure_jax_reference(x2, params)
    assert out2.shape == (44, NUM_OUTPUTS)
    assert jnp.allclose(out2, ref2, atol=4e-2, rtol=0.0), "mismatch vs JAX reference (B=44)"

    print("KERNEL_OK")
</pallas_src>

<mosaic_0001>
module attributes {stable_mosaic.version = 11 : i64} {
  func.func @_mlp_kernel(%arg0: i32, %arg1: memref<8x128xf32, #tpu.memory_space<vmem>>, %arg2: memref<128x128xbf16, #tpu.memory_space<vmem>>, %arg3: memref<4x128x128xbf16, #tpu.memory_space<vmem>>, %arg4: memref<5x1x128xf32, #tpu.memory_space<vmem>>, %arg5: memref<8x128xbf16, #tpu.memory_space<vmem>>) attributes {dimension_semantics = [#tpu.dimension_semantics<parallel>], iteration_bounds = array<i64: 1>, scalar_prefetch = 0 : i64, scratch_operands = 0 : i64, tpu.core_type = #tpu.core_type<tc>, window_params = [{transform_indices = @transform_0, window_bounds = array<i64: 8, 128>}, {pipeline_mode = #tpu.pipeline_mode<synchronous>, transform_indices = @transform_1, window_bounds = array<i64: 128, 128>}, {pipeline_mode = #tpu.pipeline_mode<synchronous>, transform_indices = @transform_2, window_bounds = array<i64: 4, 128, 128>}, {pipeline_mode = #tpu.pipeline_mode<synchronous>, transform_indices = @transform_3, window_bounds = array<i64: 5, 1, 128>}, {transform_indices = @transform_4, window_bounds = array<i64: 8, 128>}]} {
    %c0 = arith.constant 0 : index
    %c0_0 = arith.constant 0 : index
    %0 = vector.load %arg1[%c0, %c0_0] : memref<8x128xf32, #tpu.memory_space<vmem>>, vector<8x128xf32>
    %1 = arith.truncf %0 : vector<8x128xf32> to vector<8x128xbf16>
    %c0_1 = arith.constant 0 : index
    %c0_2 = arith.constant 0 : index
    %2 = vector.load %arg2[%c0_1, %c0_2] : memref<128x128xbf16, #tpu.memory_space<vmem>>, vector<128x128xbf16>
    %cst = arith.constant dense<0.000000e+00> : vector<8x128xf32>
    %3 = tpu.matmul %1, %2, %cst {dimension_numbers = #tpu.dot_dimension_numbers<[1], [0], [0], [1], [0, 0, 1, 1], [], []>} : vector<8x128xbf16>, vector<128x128xbf16>, vector<8x128xf32> -> vector<8x128xf32>
    %c0_3 = arith.constant 0 : index
    %c0_4 = arith.constant 0 : index
    %c0_5 = arith.constant 0 : index
    %4 = vector.load %arg4[%c0_3, %c0_4, %c0_5] : memref<5x1x128xf32, #tpu.memory_space<vmem>>, vector<1x1x128xf32>
    %5 = vector.shape_cast %4 : vector<1x1x128xf32> to vector<1x128xf32>
    %6 = vector.broadcast %5 : vector<1x128xf32> to vector<8x128xf32>
    %7 = arith.addf %3, %6 : vector<8x128xf32>
    %cst_6 = arith.constant 0.000000e+00 : f32
    %8 = vector.broadcast %cst_6 : f32 to vector<8x128xf32>
    %9 = arith.maximumf %7, %8 : vector<8x128xf32>
    %10 = arith.truncf %9 : vector<8x128xf32> to vector<8x128xbf16>
    %c0_7 = arith.constant 0 : index
    %c0_8 = arith.constant 0 : index
    %c0_9 = arith.constant 0 : index
    %11 = vector.load %arg3[%c0_7, %c0_8, %c0_9] : memref<4x128x128xbf16, #tpu.memory_space<vmem>>, vector<1x128x128xbf16>
    %12 = vector.shape_cast %11 : vector<1x128x128xbf16> to vector<128x128xbf16>
    %cst_10 = arith.constant dense<0.000000e+00> : vector<8x128xf32>
    %13 = tpu.matmul %10, %12, %cst_10 {dimension_numbers = #tpu.dot_dimension_numbers<[1], [0], [0], [1], [0, 0, 1, 1], [], []>} : vector<8x128xbf16>, vector<128x128xbf16>, vector<8x128xf32> -> vector<8x128xf32>
    %c1 = arith.constant 1 : index
    %c0_11 = arith.constant 0 : index
    %c0_12 = arith.constant 0 : index
    %14 = vector.load %arg4[%c1, %c0_11, %c0_12] : memref<5x1x128xf32, #tpu.memory_space<vmem>>, vector<1x1x128xf32>
    %15 = vector.shape_cast %14 : vector<1x1x128xf32> to vector<1x128xf32>
    %16 = vector.broadcast %15 : vector<1x128xf32> to vector<8x128xf32>
    %17 = arith.addf %13, %16 : vector<8x128xf32>
    %cst_13 = arith.constant 0.000000e+00 : f32
    %18 = vector.broadcast %cst_13 : f32 to vector<8x128xf32>
    %19 = arith.maximumf %17, %18 : vector<8x128xf32>
    %20 = arith.truncf %19 : vector<8x128xf32> to vector<8x128xbf16>
    %c1_14 = arith.constant 1 : index
    %c0_15 = arith.constant 0 : index
    %c0_16 = arith.constant 0 : index
    %21 = vector.load %arg3[%c1_14, %c0_15, %c0_16] : memref<4x128x128xbf16, #tpu.memory_space<vmem>>, vector<1x128x128xbf16>
    %22 = vector.shape_cast %21 : vector<1x128x128xbf16> to vector<128x128xbf16>
    %cst_17 = arith.constant dense<0.000000e+00> : vector<8x128xf32>
    %23 = tpu.matmul %20, %22, %cst_17 {dimension_numbers = #tpu.dot_dimension_numbers<[1], [0], [0], [1], [0, 0, 1, 1], [], []>} : vector<8x128xbf16>, vector<128x128xbf16>, vector<8x128xf32> -> vector<8x128xf32>
    %c2 = arith.constant 2 : index
    %c0_18 = arith.constant 0 : index
    %c0_19 = arith.constant 0 : index
    %24 = vector.load %arg4[%c2, %c0_18, %c0_19] : memref<5x1x128xf32, #tpu.memory_space<vmem>>, vector<1x1x128xf32>
    %25 = vector.shape_cast %24 : vector<1x1x128xf32> to vector<1x128xf32>
    %26 = vector.broadcast %25 : vector<1x128xf32> to vector<8x128xf32>
    %27 = arith.addf %23, %26 : vector<8x128xf32>
    %cst_20 = arith.constant 0.000000e+00 : f32
    %28 = vector.broadcast %cst_20 : f32 to vector<8x128xf32>
    %29 = arith.maximumf %27, %28 : vector<8x128xf32>
    %30 = arith.truncf %29 : vector<8x128xf32> to vector<8x128xbf16>
    %c2_21 = arith.constant 2 : index
    %c0_22 = arith.constant 0 : index
    %c0_23 = arith.constant 0 : index
    %31 = vector.load %arg3[%c2_21, %c0_22, %c0_23] : memref<4x128x128xbf16, #tpu.memory_space<vmem>>, vector<1x128x128xbf16>
    %32 = vector.shape_cast %31 : vector<1x128x128xbf16> to vector<128x128xbf16>
    %cst_24 = arith.constant dense<0.000000e+00> : vector<8x128xf32>
    %33 = tpu.matmul %30, %32, %cst_24 {dimension_numbers = #tpu.dot_dimension_numbers<[1], [0], [0], [1], [0, 0, 1, 1], [], []>} : vector<8x128xbf16>, vector<128x128xbf16>, vector<8x128xf32> -> vector<8x128xf32>
    %c3 = arith.constant 3 : index
    %c0_25 = arith.constant 0 : index
    %c0_26 = arith.constant 0 : index
    %34 = vector.load %arg4[%c3, %c0_25, %c0_26] : memref<5x1x128xf32, #tpu.memory_space<vmem>>, vector<1x1x128xf32>
    %35 = vector.shape_cast %34 : vector<1x1x128xf32> to vector<1x128xf32>
    %36 = vector.broadcast %35 : vector<1x128xf32> to vector<8x128xf32>
    %37 = arith.addf %33, %36 : vector<8x128xf32>
    %cst_27 = arith.constant 0.000000e+00 : f32
    %38 = vector.broadcast %cst_27 : f32 to vector<8x128xf32>
    %39 = arith.maximumf %37, %38 : vector<8x128xf32>
    %40 = arith.truncf %39 : vector<8x128xf32> to vector<8x128xbf16>
    %c3_28 = arith.constant 3 : index
    %c0_29 = arith.constant 0 : index
    %c0_30 = arith.constant 0 : index
    %41 = vector.load %arg3[%c3_28, %c0_29, %c0_30] : memref<4x128x128xbf16, #tpu.memory_space<vmem>>, vector<1x128x128xbf16>
    %42 = vector.shape_cast %41 : vector<1x128x128xbf16> to vector<128x128xbf16>
    %cst_31 = arith.constant dense<0.000000e+00> : vector<8x128xf32>
    %43 = tpu.matmul %40, %42, %cst_31 {dimension_numbers = #tpu.dot_dimension_numbers<[1], [0], [0], [1], [0, 0, 1, 1], [], []>} : vector<8x128xbf16>, vector<128x128xbf16>, vector<8x128xf32> -> vector<8x128xf32>
    %c4 = arith.constant 4 : index
    %c0_32 = arith.constant 0 : index
    %c0_33 = arith.constant 0 : index
    %44 = vector.load %arg4[%c4, %c0_32, %c0_33] : memref<5x1x128xf32, #tpu.memory_space<vmem>>, vector<1x1x128xf32>
    %45 = vector.shape_cast %44 : vector<1x1x128xf32> to vector<1x128xf32>
    %46 = vector.broadcast %45 : vector<1x128xf32> to vector<8x128xf32>
    %47 = arith.addf %43, %46 : vector<8x128xf32>
    %cst_34 = arith.constant 0.000000e+00 : f32
    %48 = vector.broadcast %cst_34 : f32 to vector<8x128xf32>
    %49 = arith.subf %48, %47 : vector<8x128xf32>
    %50 = math.exp %49 : vector<8x128xf32>
    %cst_35 = arith.constant 1.000000e+00 : f32
    %51 = vector.broadcast %cst_35 : f32 to vector<8x128xf32>
    %52 = arith.addf %51, %50 : vector<8x128xf32>
    %53 = tpu.reciprocal %52 {approx = true} : vector<8x128xf32> -> vector<8x128xf32>
    %54 = arith.truncf %53 : vector<8x128xf32> to vector<8x128xbf16>
    %c0_36 = arith.constant 0 : index
    %c0_37 = arith.constant 0 : index
    %55 = vector.load %arg5[%c0_36, %c0_37] : memref<8x128xbf16, #tpu.memory_space<vmem>>, vector<8x128xbf16>
    tpu.vector_store %arg5[%c0_36, %c0_37], %54 {strides = array<i32>} : memref<8x128xbf16, #tpu.memory_space<vmem>>, vector<8x128xbf16>,
    return
  }
  func.func @transform_0(%arg0: i32) -> (i32, i32) {
    %c0_i32 = arith.constant 0 : i32
    %c0_i32_0 = arith.constant 0 : i32
    return %arg0, %c0_i32 : i32, i32
  }
  func.func @transform_1(%arg0: i32) -> (i32, i32) {
    %c0_i32 = arith.constant 0 : i32
    %c0_i32_0 = arith.constant 0 : i32
    %c0_i32_1 = arith.constant 0 : i32
    return %c0_i32, %c0_i32_0 : i32, i32
  }
  func.func @transform_2(%arg0: i32) -> (i32, i32, i32) {
    %c0_i32 = arith.constant 0 : i32
    %c0_i32_0 = arith.constant 0 : i32
    %c0_i32_1 = arith.constant 0 : i32
    %c0_i32_2 = arith.constant 0 : i32
    return %c0_i32, %c0_i32_0, %c0_i32_1 : i32, i32, i32
  }
  func.func @transform_3(%arg0: i32) -> (i32, i32, i32) {
    %c0_i32 = arith.constant 0 : i32
    %c0_i32_0 = arith.constant 0 : i32
    %c0_i32_1 = arith.constant 0 : i32
    %c0_i32_2 = arith.constant 0 : i32
    return %c0_i32, %c0_i32_0, %c0_i32_1 : i32, i32, i32
  }
  func.func @transform_4(%arg0: i32) -> (i32, i32) {
    %c0_i32 = arith.constant 0 : i32
    %c0_i32_0 = arith.constant 0 : i32
    return %arg0, %c0_i32 : i32, i32
  }
}

</mosaic_0001>

<llo_original>
// kernel: end2end_forward.1
$region0: #{end2end_forward.1}
  #allocation0 [shape = 'u32[]', space=smem, size = 0x4, offset = 0x4, fixed_abs, tag = 'smem constant byte address 0x4 - core index']
  #allocation1 [shape = 'u32[72,128]{1,0:T(1,128)}', space=vmem, size = 0x9000, scoped, tag = 'internal scratch']
  %s0 = inlined_call_operand.vmem [shape: f32[8,128], index: 0, kind: input, shape index: {}]
  %s1 = inlined_call_operand.vmem [shape: bf16[128,128], index: 1, kind: input, shape index: {}]
  %s2 = inlined_call_operand.hbm [shape: bf16[4,128,128], index: 2, kind: input, shape index: {}]
  %s3 = inlined_call_operand.vmem [shape: f32[5,1,128], index: 3, kind: input, shape index: {}]
  %s4 = inlined_call_operand.vmem [shape: bf16[8,128], index: 4, kind: output, shape index: {}]
  %s5 = sld [smem:[#allocation0]]
  $region30: #{end2end_forward.1} parent=0
    _
  %s7 = ssub.s32 1, %s5
  %s8 = scalar_select 0, %s7, %s5
  $region1: #{end2end_forward.1} parent=0
    #allocation2 [shape = 'u8[131072]{0}', space=vmem, size = 0x20000, scoped, tag = 'input window, operand 2, single buffered']
    #allocation3 [shape = 's32[1]{0}', space=sflag, size = 0x4, scoped, tag = 'scoped memory for end2end_forward.1']
    %9 = vsyncpa [#allocation3], 0
    // Predicated region
    $region2: #{end2end_forward.1} parent=1 // pred_check
      _
    $region3: #{end2end_forward.1} parent=1 // pred_check_branch
      %11 = sbr.rel (0) target = $region5
    $region4: #{end2end_forward.1} parent=1 // pred_region
      _
    $region5: #{end2end_forward.1} parent=1 // pred_fallthru
      _
    // Predicated region
    $region6: #{end2end_forward.1} parent=1 // pred_check
      _
    $region7: #{end2end_forward.1} parent=1 // pred_check_branch
      %13 = sbr.rel (0) target = $region9
    $region8: #{end2end_forward.1} parent=1 // pred_region
      _
    $region9: #{end2end_forward.1} parent=1 // pred_fallthru
      _
    // Predicated region
    $region10: #{end2end_forward.1} parent=1 // pred_check
      _
    $region11: #{end2end_forward.1} parent=1 // pred_check_branch
      %15 = sbr.rel (0) target = $region13
    $region12: #{end2end_forward.1} parent=1 // pred_region
      %17 = vsyncadd [#allocation3], 0
      %s18 = sshll.u32 %s2, 4
      %s19 = int_to_ptr.hbm [resolvable:$true] %s18
      %s20 = sshll.u32 [#allocation2], 4
      %s21 = int_to_ptr.vmem [resolvable:$true] %s20
      %26 = dma.hbm_to_vmem [thread:$0]  %s19, 4096, %s21, [#allocation3], 64, 64, 4
    $region13: #{end2end_forward.1} parent=1 // pred_fallthru
      _
    // Predicated region
    $region14: #{end2end_forward.1} parent=1 // pred_check
      _
    $region15: #{end2end_forward.1} parent=1 // pred_check_branch
      %28 = sbr.rel (0) target = $region17
    $region16: #{end2end_forward.1} parent=1 // pred_region
      _
    $region17: #{end2end_forward.1} parent=1 // pred_fallthru
      _
    // Predicated region
    $region18: #{end2end_forward.1} parent=1 // pred_check
      _
    $region19: #{end2end_forward.1} parent=1 // pred_check_branch
      %30 = sbr.rel (0) target = $region21
    $region20: #{end2end_forward.1} parent=1 // pred_region
      %32 = dma.done [#allocation3], 4096
    $region21: #{end2end_forward.1} parent=1 // pred_fallthru
      _
    %v33 = vld [vmem:[%s0] sm:$0xff]
    %v34 = vpack.c.bf16 %v33, %v33
    %v35 = vld [vmem:[%s1] sm:$0xf]
    %v36 = vld [vmem:[%s1 + $0x4] sm:$0xf]
    %v37 = vld [vmem:[%s1 + $0x8] sm:$0xf]
    %v38 = vld [vmem:[%s1 + $0xc] sm:$0xf]
    %v39 = vld [vmem:[%s1 + $0x10] sm:$0xf]
    %v40 = vld [vmem:[%s1 + $0x14] sm:$0xf]
    %v41 = vld [vmem:[%s1 + $0x18] sm:$0xf]
    %v42 = vld [vmem:[%s1 + $0x1c] sm:$0xf]
    %v43 = vld [vmem:[%s1 + $0x20] sm:$0xf]
    %v44 = vld [vmem:[%s1 + $0x24] sm:$0xf]
    %v45 = vld [vmem:[%s1 + $0x28] sm:$0xf]
    %v46 = vld [vmem:[%s1 + $0x2c] sm:$0xf]
    %v47 = vld [vmem:[%s1 + $0x30] sm:$0xf]
    %v48 = vld [vmem:[%s1 + $0x34] sm:$0xf]
    %v49 = vld [vmem:[%s1 + $0x38] sm:$0xf]
    %v50 = vld [vmem:[%s1 + $0x3c] sm:$0xf]
    %v51 = vld [vmem:[%s3] sm:$0x1]
    %v53 = vperm.slane %v51, 0
    %v71 = vunpack.c.l.b16 %v35
    %v72 = vunpack.c.l.b16 %v36
    %v73 = vunpack.c.l.b16 %v37
    %v74 = vunpack.c.l.b16 %v38
    %v75 = vunpack.c.l.b16 %v39
    %v76 = vunpack.c.l.b16 %v40
    %v77 = vunpack.c.l.b16 %v41
    %v78 = vunpack.c.l.b16 %v42
    %v79 = vunpack.c.l.b16 %v43
    %v80 = vunpack.c.l.b16 %v44
    %v81 = vunpack.c.l.b16 %v45
    %v82 = vunpack.c.l.b16 %v46
    %v83 = vunpack.c.l.b16 %v47
    %v84 = vunpack.c.l.b16 %v48
    %v85 = vunpack.c.l.b16 %v49
    %v86 = vunpack.c.l.b16 %v50
    %v87 = vpack.c.b16 %v72, %v71
    %v88 = vpack.c.b16 %v74, %v73
    %v89 = vpack.c.b16 %v76, %v75
    %v90 = vpack.c.b16 %v78, %v77
    %v91 = vpack.c.b16 %v80, %v79
    %v92 = vpack.c.b16 %v82, %v81
    %v93 = vpack.c.b16 %v84, %v83
    %v94 = vpack.c.b16 %v86, %v85
    %103 = vmatpush.bf16.msra.mxu0 %v94
    %104 = vmatpush.bf16.msra.mxu0 %v93
    %105 = vmatpush.bf16.msra.mxu0 %v92
    %106 = vmatpush.bf16.msra.mxu0 %v91
    %107 = vmatpush.bf16.msra.mxu0 %v90
    %108 = vmatpush.bf16.msra.mxu0 %v89
    %109 = vmatpush.bf16.msra.mxu0 %v88
    %110 = vmatpush.bf16.msra.mxu0 %v87
    %111 = vmatmul.bf16.gmra.mxu0 %v34
    %v112 = vpop.f32.mrf.mxu0
    %v113 = vadd.f32 %v53, %v112
    %v114 = vpop.f32.mrf.mxu0
    %115 = vdwg.mxu0
    %v116 = vmax.f32 %v113, 0.0
    %v117 = vpack.c.bf16 %v116, %v116
    %v118 = vld [vmem:[#allocation2] sm:$0xf]
    %v119 = vld [vmem:[#allocation2 + $0x4] sm:$0xf]
    %v120 = vld [vmem:[#allocation2 + $0x8] sm:$0xf]
    %v121 = vld [vmem:[#allocation2 + $0xc] sm:$0xf]
    %v122 = vld [vmem:[#allocation2 + $0x10] sm:$0xf]
    %v123 = vld [vmem:[#allocation2 + $0x14] sm:$0xf]
    %v124 = vld [vmem:[#allocation2 + $0x18] sm:$0xf]
    %v125 = vld [vmem:[#allocation2 + $0x1c] sm:$0xf]
    %v126 = vld [vmem:[#allocation2 + $0x20] sm:$0xf]
    %v127 = vld [vmem:[#allocation2 + $0x24] sm:$0xf]
    %v128 = vld [vmem:[#allocation2 + $0x28] sm:$0xf]
    %v129 = vld [vmem:[#allocation2 + $0x2c] sm:$0xf]
    %v130 = vld [vmem:[#allocation2 + $0x30] sm:$0xf]
    %v131 = vld [vmem:[#allocation2 + $0x34] sm:$0xf]
    %v132 = vld [vmem:[#allocation2 + $0x38] sm:$0xf]
    %v133 = vld [vmem:[#allocation2 + $0x3c] sm:$0xf]
    %s134 = scalar_lea.vmem %s3, 1
    %v135 = vld [vmem:[%s134] sm:$0x1]
    %v137 = vperm.slane %v135, 0
    %v155 = vunpack.c.l.b16 %v118
    %v156 = vunpack.c.l.b16 %v119
    %v157 = vunpack.c.l.b16 %v120
    %v158 = vunpack.c.l.b16 %v121
    %v159 = vunpack.c.l.b16 %v122
    %v160 = vunpack.c.l.b16 %v123
    %v161 = vunpack.c.l.b16 %v124
    %v162 = vunpack.c.l.b16 %v125
    %v163 = vunpack.c.l.b16 %v126
    %v164 = vunpack.c.l.b16 %v127
    %v165 = vunpack.c.l.b16 %v128
    %v166 = vunpack.c.l.b16 %v129
    %v167 = vunpack.c.l.b16 %v130
    %v168 = vunpack.c.l.b16 %v131
    %v169 = vunpack.c.l.b16 %v132
    %v170 = vunpack.c.l.b16 %v133
    %v171 = vpack.c.b16 %v156, %v155
    %v172 = vpack.c.b16 %v158, %v157
    %v173 = vpack.c.b16 %v160, %v159
    %v174 = vpack.c.b16 %v162, %v161
    %v175 = vpack.c.b16 %v164, %v163
    %v176 = vpack.c.b16 %v166, %v165
    %v177 = vpack.c.b16 %v168, %v167
    %v178 = vpack.c.b16 %v170, %v169
    %187 = vmatpush.bf16.msra.mxu0 %v178
    %188 = vmatpush.bf16.msra.mxu0 %v177
    %189 = vmatpush.bf16.msra.mxu0 %v176
    %190 = vmatpush.bf16.msra.mxu0 %v175
    %191 = vmatpush.bf16.msra.mxu0 %v174
    %192 = vmatpush.bf16.msra.mxu0 %v173
    %193 = vmatpush.bf16.msra.mxu0 %v172
    %194 = vmatpush.bf16.msra.mxu0 %v171
    %195 = vmatmul.bf16.gmra.mxu0 %v117
    %v196 = vpop.f32.mrf.mxu0
    %v197 = vadd.f32 %v137, %v196
    %v198 = vpop.f32.mrf.mxu0
    %199 = vdwg.mxu0
    %v200 = vmax.f32 %v197, 0.0
    %v201 = vpack.c.bf16 %v200, %v200
    %s202 = scalar_lea.vmem [#allocation2], 64
    %v203 = vld [vmem:[%s202] sm:$0xf]
    %v204 = vld [vmem:[%s202 + $0x4] sm:$0xf]
    %v205 = vld [vmem:[%s202 + $0x8] sm:$0xf]
    %v206 = vld [vmem:[%s202 + $0xc] sm:$0xf]
    %v207 = vld [vmem:[%s202 + $0x10] sm:$0xf]
    %v208 = vld [vmem:[%s202 + $0x14] sm:$0xf]
    %v209 = vld [vmem:[%s202 + $0x18] sm:$0xf]
    %v210 = vld [vmem:[%s202 + $0x1c] sm:$0xf]
    %v211 = vld [vmem:[%s202 + $0x20] sm:$0xf]
    %v212 = vld [vmem:[%s202 + $0x24] sm:$0xf]
    %v213 = vld [vmem:[%s202 + $0x28] sm:$0xf]
    %v214 = vld [vmem:[%s202 + $0x2c] sm:$0xf]
    %v215 = vld [vmem:[%s202 + $0x30] sm:$0xf]
    %v216 = vld [vmem:[%s202 + $0x34] sm:$0xf]
    %v217 = vld [vmem:[%s202 + $0x38] sm:$0xf]
    %v218 = vld [vmem:[%s202 + $0x3c] sm:$0xf]
    %s219 = scalar_lea.vmem %s3, 2
    %v220 = vld [vmem:[%s219] sm:$0x1]
    %v222 = vperm.slane %v220, 0
    %v240 = vunpack.c.l.b16 %v203
    %v241 = vunpack.c.l.b16 %v204
    %v242 = vunpack.c.l.b16 %v205
    %v243 = vunpack.c.l.b16 %v206
    %v244 = vunpack.c.l.b16 %v207
    %v245 = vunpack.c.l.b16 %v208
    %v246 = vunpack.c.l.b16 %v209
    %v247 = vunpack.c.l.b16 %v210
    %v248 = vunpack.c.l.b16 %v211
    %v249 = vunpack.c.l.b16 %v212
    %v250 = vunpack.c.l.b16 %v213
    %v251 = vunpack.c.l.b16 %v214
    %v252 = vunpack.c.l.b16 %v215
    %v253 = vunpack.c.l.b16 %v216
    %v254 = vunpack.c.l.b16 %v217
    %v255 = vunpack.c.l.b16 %v218
    %v256 = vpack.c.b16 %v241, %v240
    %v257 = vpack.c.b16 %v243, %v242
    %v258 = vpack.c.b16 %v245, %v244
    %v259 = vpack.c.b16 %v247, %v246
    %v260 = vpack.c.b16 %v249, %v248
    %v261 = vpack.c.b16 %v251, %v250
    %v262 = vpack.c.b16 %v253, %v252
    %v263 = vpack.c.b16 %v255, %v254
    %272 = vmatpush.bf16.msra.mxu0 %v263
    %273 = vmatpush.bf16.msra.mxu0 %v262
    %274 = vmatpush.bf16.msra.mxu0 %v261
    %275 = vmatpush.bf16.msra.mxu0 %v260
    %276 = vmatpush.bf16.msra.mxu0 %v259
    %277 = vmatpush.bf16.msra.mxu0 %v258
    %278 = vmatpush.bf16.msra.mxu0 %v257
    %279 = vmatpush.bf16.msra.mxu0 %v256
    %280 = vmatmul.bf16.gmra.mxu0 %v201
    %v281 = vpop.f32.mrf.mxu0
    %v282 = vadd.f32 %v222, %v281
    %v283 = vpop.f32.mrf.mxu0
    %284 = vdwg.mxu0
    %v285 = vmax.f32 %v282, 0.0
    %v286 = vpack.c.bf16 %v285, %v285
    %s287 = scalar_lea.vmem [#allocation2], 128
    %v288 = vld [vmem:[%s287] sm:$0xf]
    %v289 = vld [vmem:[%s287 + $0x4] sm:$0xf]
    %v290 = vld [vmem:[%s287 + $0x8] sm:$0xf]
    %v291 = vld [vmem:[%s287 + $0xc] sm:$0xf]
    %v292 = vld [vmem:[%s287 + $0x10] sm:$0xf]
    %v293 = vld [vmem:[%s287 + $0x14] sm:$0xf]
    %v294 = vld [vmem:[%s287 + $0x18] sm:$0xf]
    %v295 = vld [vmem:[%s287 + $0x1c] sm:$0xf]
    %v296 = vld [vmem:[%s287 + $0x20] sm:$0xf]
    %v297 = vld [vmem:[%s287 + $0x24] sm:$0xf]
    %v298 = vld [vmem:[%s287 + $0x28] sm:$0xf]
    %v299 = vld [vmem:[%s287 + $0x2c] sm:$0xf]
    %v300 = vld [vmem:[%s287 + $0x30] sm:$0xf]
    %v301 = vld [vmem:[%s287 + $0x34] sm:$0xf]
    %v302 = vld [vmem:[%s287 + $0x38] sm:$0xf]
    %v303 = vld [vmem:[%s287 + $0x3c] sm:$0xf]
    %s304 = scalar_lea.vmem %s3, 3
    %v305 = vld [vmem:[%s304] sm:$0x1]
    %v307 = vperm.slane %v305, 0
    %v325 = vunpack.c.l.b16 %v288
    %v326 = vunpack.c.l.b16 %v289
    %v327 = vunpack.c.l.b16 %v290
    %v328 = vunpack.c.l.b16 %v291
    %v329 = vunpack.c.l.b16 %v292
    %v330 = vunpack.c.l.b16 %v293
    %v331 = vunpack.c.l.b16 %v294
    %v332 = vunpack.c.l.b16 %v295
    %v333 = vunpack.c.l.b16 %v296
    %v334 = vunpack.c.l.b16 %v297
    %v335 = vunpack.c.l.b16 %v298
    %v336 = vunpack.c.l.b16 %v299
    %v337 = vunpack.c.l.b16 %v300
    %v338 = vunpack.c.l.b16 %v301
    %v339 = vunpack.c.l.b16 %v302
    %v340 = vunpack.c.l.b16 %v303
    %v341 = vpack.c.b16 %v326, %v325
    %v342 = vpack.c.b16 %v328, %v327
    %v343 = vpack.c.b16 %v330, %v329
    %v344 = vpack.c.b16 %v332, %v331
    %v345 = vpack.c.b16 %v334, %v333
    %v346 = vpack.c.b16 %v336, %v335
    %v347 = vpack.c.b16 %v338, %v337
    %v348 = vpack.c.b16 %v340, %v339
    %357 = vmatpush.bf16.msra.mxu0 %v348
    %358 = vmatpush.bf16.msra.mxu0 %v347
    %359 = vmatpush.bf16.msra.mxu0 %v346
    %360 = vmatpush.bf16.msra.mxu0 %v345
    %361 = vmatpush.bf16.msra.mxu0 %v344
    %362 = vmatpush.bf16.msra.mxu0 %v343
    %363 = vmatpush.bf16.msra.mxu0 %v342
    %364 = vmatpush.bf16.msra.mxu0 %v341
    %365 = vmatmul.bf16.gmra.mxu0 %v286
    %v366 = vpop.f32.mrf.mxu0
    %v367 = vadd.f32 %v307, %v366
    %v368 = vpop.f32.mrf.mxu0
    %369 = vdwg.mxu0
    %v370 = vmax.f32 %v367, 0.0
    %v371 = vpack.c.bf16 %v370, %v370
    %s372 = scalar_lea.vmem [#allocation2], 192
    %v373 = vld [vmem:[%s372] sm:$0xf]
    %v374 = vld [vmem:[%s372 + $0x4] sm:$0xf]
    %v375 = vld [vmem:[%s372 + $0x8] sm:$0xf]
    %v376 = vld [vmem:[%s372 + $0xc] sm:$0xf]
    %v377 = vld [vmem:[%s372 + $0x10] sm:$0xf]
    %v378 = vld [vmem:[%s372 + $0x14] sm:$0xf]
    %v379 = vld [vmem:[%s372 + $0x18] sm:$0xf]
    %v380 = vld [vmem:[%s372 + $0x1c] sm:$0xf]
    %v381 = vld [vmem:[%s372 + $0x20] sm:$0xf]
    %v382 = vld [vmem:[%s372 + $0x24] sm:$0xf]
    %v383 = vld [vmem:[%s372 + $0x28] sm:$0xf]
    %v384 = vld [vmem:[%s372 + $0x2c] sm:$0xf]
    %v385 = vld [vmem:[%s372 + $0x30] sm:$0xf]
    %v386 = vld [vmem:[%s372 + $0x34] sm:$0xf]
    %v387 = vld [vmem:[%s372 + $0x38] sm:$0xf]
    %v388 = vld [vmem:[%s372 + $0x3c] sm:$0xf]
    %s389 = scalar_lea.vmem %s3, 4
    %v390 = vld [vmem:[%s389] sm:$0x1]
    %v392 = vperm.slane %v390, 0
    %v410 = vunpack.c.l.b16 %v373
    %v411 = vunpack.c.l.b16 %v374
    %v412 = vunpack.c.l.b16 %v375
    %v413 = vunpack.c.l.b16 %v376
    %v414 = vunpack.c.l.b16 %v377
    %v415 = vunpack.c.l.b16 %v378
    %v416 = vunpack.c.l.b16 %v379
    %v417 = vunpack.c.l.b16 %v380
    %v418 = vunpack.c.l.b16 %v381
    %v419 = vunpack.c.l.b16 %v382
    %v420 = vunpack.c.l.b16 %v383
    %v421 = vunpack.c.l.b16 %v384
    %v422 = vunpack.c.l.b16 %v385
    %v423 = vunpack.c.l.b16 %v386
    %v424 = vunpack.c.l.b16 %v387
    %v425 = vunpack.c.l.b16 %v388
    %v426 = vpack.c.b16 %v411, %v410
    %v427 = vpack.c.b16 %v413, %v412
    %v428 = vpack.c.b16 %v415, %v414
    %v429 = vpack.c.b16 %v417, %v416
    %v430 = vpack.c.b16 %v419, %v418
    %v431 = vpack.c.b16 %v421, %v420
    %v432 = vpack.c.b16 %v423, %v422
    %v433 = vpack.c.b16 %v425, %v424
    %442 = vmatpush.bf16.msra.mxu0 %v433
    %443 = vmatpush.bf16.msra.mxu0 %v432
    %444 = vmatpush.bf16.msra.mxu0 %v431
    %445 = vmatpush.bf16.msra.mxu0 %v430
    %446 = vmatpush.bf16.msra.mxu0 %v429
    %447 = vmatpush.bf16.msra.mxu0 %v428
    %448 = vmatpush.bf16.msra.mxu0 %v427
    %449 = vmatpush.bf16.msra.mxu0 %v426
    %450 = vmatmul.bf16.gmra.mxu0 %v371
    %v451 = vpop.f32.mrf.mxu0
    %v452 = vadd.f32 %v392, %v451
    %v453 = vpop.f32.mrf.mxu0
    %454 = vdwg.mxu0
    %v455 = vsub.f32 0.0, %v452
    %v456 = vmul.f32 %v455, 1.442695
    %v457 = vpow.pop %v456
    %v458 = vadd.f32 %v457, 1.0
    %v459 = vrcp.pop %v458
    %v460 = vpack.c.bf16 %v459, %v459
    %461 = vst [vmem:[%s4] sm:$0xf] %v460
    // Predicated region
    $region22: #{end2end_forward.1} parent=1 // pred_check
      _
    $region23: #{end2end_forward.1} parent=1 // pred_check_branch
      %463 = sbr.rel (0) target = $region25
    $region24: #{end2end_forward.1} parent=1 // pred_region
      _
    $region25: #{end2end_forward.1} parent=1 // pred_fallthru
      _
    // Predicated region
    $region26: #{end2end_forward.1} parent=1 // pred_check
      _
    $region27: #{end2end_forward.1} parent=1 // pred_check_branch
      %465 = sbr.rel (0) target = $region29
    $region28: #{end2end_forward.1} parent=1 // pred_region
      _
    $region29: #{end2end_forward.1} parent=1 // pred_fallthru
      _
    %466 = vsyncpa [#allocation3], 1

</llo_original>
